<compile_context>
chip_gen: v6e
topology: v6e:2x2x1
jax: 0.10.0
libtpu: 0.0.40
codegen_flags: <defaults>
</compile_context>

<pallas_src>
import functools

import numpy as np
import jax
import jax.numpy as jnp
from jax.experimental import pallas as pl
from jax.experimental.pallas import tpu as pltpu

COS_EPS = 1e-8  # matches torch.nn.CosineSimilarity(eps=1e-8)


def _pick_row_tile(n, target):
    """Largest multiple of 8 that divides `n` and is <= target."""
    for cand in range(min(target, n), 7, -1):
        if cand % 8 == 0 and n % cand == 0:
            return cand
    raise ValueError(f"cannot tile dimension of size {n} (need a multiple of 8)")


def _pick_col_tile(n, target):
    """Largest divisor of n <= target that is a multiple of 128 (preferred),
    else the largest divisor <= 128 that is a multiple of 8 (keeps the
    lane-shaped accumulator groups 128-aligned)."""
    best_small = None
    for cand in range(min(target, n), 7, -1):
        if n % cand or cand % 8:
            continue
        if cand % 128 == 0:
            return cand
        if best_small is None and cand <= 128:
            best_small = cand
    if best_small is not None:
        return best_small
    raise ValueError(f"cannot tile dimension of size {n} (need a multiple of 8)")


def _normalize_kernel(zi_ref, zj_ref, zn_ref, *, row_scale):
    """Row-normalize one block of each half and scale by sqrt(1/T).

    Output block is (2, TM, D): slot 0 <- z_i rows, slot 1 <- z_j rows, so the
    cat(z_i, z_j) never materializes separately (reshape to (N, D) is free).
    """
    def _norm(x):
        x = x.astype(jnp.float32)
        ssq = jnp.sum(x * x, axis=-1, keepdims=True)
        # max(||x||, eps) == sqrt(max(ssq, eps^2)); rsqrt goes to the EUP slot.
        inv = jax.lax.rsqrt(jnp.maximum(ssq, COS_EPS * COS_EPS)) * row_scale
        return (x * inv).astype(zn_ref.dtype)

    zn_ref[0, :, :] = _norm(zi_ref[...])
    zn_ref[1, :, :] = _norm(zj_ref[...])


def _ntxent_kernel(q_ref, k_ref, p_ref, o_ref, l_ref, *, inv_temp, tm, tk, lane_w):
    """One (TM row-block, TK col-block) step of the NT-Xent loss.

    q_ref: (TM, D) rows (unit-norm * sqrt(1/T), matmul dtype)   row tile i
    k_ref: (TK, D) rows                                          col tile j
    p_ref: (TM, D) partner rows of tile i
    o_ref: (TM, 1) per-row loss term, written on the last column step
    l_ref: (TM, lane_w) f32 lane-shaped running sum of exp(sim - 1/T)
    """
    i = pl.program_id(0)
    j = pl.program_id(1)

    @pl.when(j == 0)
    def _():
        l_ref[...] = jnp.zeros_like(l_ref)

    # Similarity tile.  1/T is already folded into the operands (stage 1), so
    # the inner loop is a pure MXU op with f32 accumulation; NT contraction on
    # the lane dim of both operands avoids any explicit transpose.
    s = jax.lax.dot_general(
        q_ref[...], k_ref[...],
        dimension_numbers=(((1,), (1,)), ((), ())),
        preferred_element_type=jnp.float32)                       # (TM, TK) f32

    # cosine <= 1  =>  sim <= 1/T (up to rounding), so m = 1/T is the row max:
    # no running max, exponents <= ~0, numerically stable.
    e = jnp.exp(s - inv_temp)                                     # (TM, TK) f32

    # Lane-shaped accumulation: fold the TK/lane_w lane groups with VPU adds
    # (no per-step XLU reduce); the single cross-lane reduce runs in the epilogue.
    acc = e[:, 0:lane_w]
    for g in range(1, tk // lane_w):
        acc = acc + e[:, g * lane_w:(g + 1) * lane_w]
    l_ref[...] = l_ref[...] + acc

    # Exact diagonal exclusion: only the column block that overlaps this row
    # block's diagonal pays the iota/compare/select cost (once per row block).
    @pl.when(jnp.logical_and(j * tk < (i + 1) * tm, (j + 1) * tk > i * tm))
    def _():
        rows = i * tm + jax.lax.broadcasted_iota(jnp.int32, (tm, tk), 0)
        cols = j * tk + jax.lax.broadcasted_iota(jnp.int32, (tm, tk), 1)
        d = jnp.where(rows == cols, e, 0.0)
        corr = d[:, 0:lane_w]
        for g in range(1, tk // lane_w):
            corr = corr + d[:, g * lane_w:(g + 1) * lane_w]
        l_ref[...] = l_ref[...] - corr

    @pl.when(j == pl.num_programs(1) - 1)
    def _():
        qf = q_ref[...].astype(jnp.float32)
        pf = p_ref[...].astype(jnp.float32)
        # Positive pair sim[i, (i+B) mod N]; 1/T already folded into the rows.
        pos = jnp.sum(qf * pf, axis=-1, keepdims=True)
        row_sum = jnp.sum(l_ref[...], axis=-1, keepdims=True)     # 128->1 reduce, once
        o_ref[...] = (inv_temp + jnp.log(row_sum)) - pos          # lse_{j!=i} - pos


def simclr_loss_pallas(z_i, z_j, batch_size, temperature, *,
                       matmul_dtype=jnp.bfloat16, tile_target=512,
                       k_resident_bytes=4 * 1024 * 1024):
    B, D = z_i.shape
    assert z_j.shape == (B, D)
    assert B == batch_size
    assert B % 8 == 0, "batch_size must be a multiple of 8 for TPU tiling"
    N = 2 * B
    inv_temp = 1.0 / float(temperature)
    row_scale = float(np.sqrt(inv_temp))   # fold sqrt(1/T) into each row

    # Lane-align the feature dim (zero padding changes neither norms nor dots).
    if D % 128 != 0:
        pad = 128 - (D % 128)
        z_i = jnp.pad(z_i, ((0, 0), (0, pad)))
        z_j = jnp.pad(z_j, ((0, 0), (0, pad)))
        D += pad

    itemsize = int(jnp.dtype(matmul_dtype).itemsize)

    # Row tile divides B so tiles never span the two halves (partner block is
    # a single contiguous block).  Column tile: keep k fully VMEM-resident when
    # it is cheap (biggest win on v5e's slower HBM), bounded so the (TM, TK)
    # f32 temporaries stay small enough for v7x's 64 MiB VMEM.
    TM = _pick_row_tile(B, tile_target)
    tk_cap = max(128, (8 * 1024 * 1024) // (TM * 16))   # ~4 live (TM,TK) f32 temps <= 8 MiB
    want_resident = N * D * itemsize <= k_resident_bytes
    col_target = min(N if want_resident else tile_target, tk_cap)
    TK = _pick_col_tile(N, max(col_target, 8))
    lane_w = min(TK, 128)
    assert TK % lane_w == 0

    num_row_blocks = N // TM
    num_col_blocks = N // TK
    half_blocks = B // TM

    # --- Stage 1: row normalization + sqrt(1/T) scaling (cat fused via output layout) ---
    zn2 = pl.pallas_call(
        functools.partial(_normalize_kernel, row_scale=row_scale),
        out_shape=jax.ShapeDtypeStruct((2, B, D), matmul_dtype),
        grid=(B // TM,),
        in_specs=[
            pl.BlockSpec((TM, D), lambda i: (i, 0)),
            pl.BlockSpec((TM, D), lambda i: (i, 0)),
        ],
        out_specs=pl.BlockSpec((2, TM, D), lambda i: (0, i, 0)),
        compiler_params=pltpu.CompilerParams(dimension_semantics=("parallel",)),
    )(z_i, z_j)
    zn = zn2.reshape(N, D)   # contiguous -> free view; this IS cat(z_i, z_j) normalized

    # VMEM budget for stage 2 (double-buffered inputs + scratch + temporaries).
    vmem_est = (
        2 * TM * D * itemsize        # q rows (double buffered)
        + 2 * TM * D * itemsize      # partner rows
        + 2 * TK * D * itemsize      # k columns
        + TM * lane_w * 4            # sum-of-exp scratch
        + 2 * TM * 128 * 4           # (TM, 1) output block (lane padded)
        + 4 * TM * TK * 4            # s / exp / mask temporaries (headroom)
    )
    vmem_limit = int(min(max(vmem_est * 2, 32 * 1024 * 1024), 48 * 1024 * 1024))

    cost = pl.CostEstimate(
        flops=2 * N * N * D + 8 * N * D,
        transcendentals=N * N + 2 * N,
        bytes_accessed=(num_row_blocks * N * D + 2 * N * D) * itemsize + 8 * N,
    )

    # --- Stage 2: tiled NT-Xent with fixed-max online sum-of-exp ---
    per_row = pl.pallas_call(
        functools.partial(_ntxent_kernel, inv_temp=inv_temp,
                          tm=TM, tk=TK, lane_w=lane_w),
        out_shape=jax.ShapeDtypeStruct((N, 1), jnp.float32),
        grid=(num_row_blocks, num_col_blocks),
        in_specs=[
            pl.BlockSpec((TM, D), lambda i, j: (i, 0)),                                   # rows
            pl.BlockSpec((TK, D), lambda i, j: (j, 0)),                                   # cols
            pl.BlockSpec((TM, D), lambda i, j: ((i + half_blocks) % num_row_blocks, 0)),  # partners
        ],
        out_specs=pl.BlockSpec((TM, 1), lambda i, j: (i, 0)),
        scratch_shapes=[pltpu.VMEM((TM, lane_w), jnp.float32)],
        compiler_params=pltpu.CompilerParams(
            dimension_semantics=("parallel", "arbitrary"),
            vmem_limit_bytes=vmem_limit),
        cost_estimate=cost,
    )(zn, zn, zn)

    # Tiny final reduction kept in JAX so the row axis stays megacore-parallel.
    return jnp.sum(per_row) / N


def simclr_loss_ref_np(z_i, z_j, batch_size, temperature):
    """float64 NumPy ground truth, literal to the PyTorch forward semantics."""
    N = 2 * batch_size
    z = np.concatenate([np.asarray(z_i, np.float64), np.asarray(z_j, np.float64)], 0)
    zn = z / np.maximum(np.linalg.norm(z, axis=-1, keepdims=True), COS_EPS)
    sim = (zn @ zn.T) / float(temperature)
    idx = np.arange(N)
    pos = sim[idx, (idx + batch_size) % N]
    # CE(label=0) over [pos, negatives] == logsumexp over j != i minus pos.
    sim_nd = sim.copy()
    np.fill_diagonal(sim_nd, -np.inf)
    m = sim_nd.max(axis=1, keepdims=True)
    lse = m[:, 0] + np.log(np.exp(sim_nd - m).sum(axis=1))
    return float((lse - pos).sum() / N)


if __name__ == "__main__":
    batch_size = 32      # as in the original script
    hidden = 128
    temperature = 0.5

    key = jax.random.PRNGKey(0)
    k1, k2 = jax.random.split(key)
    z_i = jax.random.normal(k1, (batch_size, hidden), dtype=jnp.float32)
    z_j = jax.random.normal(k2, (batch_size, hidden), dtype=jnp.float32)

    ref = simclr_loss_ref_np(z_i, z_j, batch_size, temperature)

    # Default (performance) path: bf16 operands, f32 accumulation.
    loss_bf16 = jax.block_until_ready(
        simclr_loss_pallas(z_i, z_j, batch_size, temperature))
    assert np.isfinite(float(loss_bf16)), float(loss_bf16)
    assert abs(float(loss_bf16) - ref) <= 5e-3 + 2e-3 * abs(ref), (float(loss_bf16), ref)

    # f32 path: tight correctness check against the float64 reference.
    loss_f32 = jax.block_until_ready(
        simclr_loss_pallas(z_i, z_j, batch_size, temperature,
                           matmul_dtype=jnp.float32))
    assert np.isfinite(float(loss_f32)), float(loss_f32)
    assert abs(float(loss_f32) - ref) <= 1e-4 + 1e-4 * abs(ref), (float(loss_f32), ref)

    print("KERNEL_OK")
</pallas_src>

<mosaic_0001>
module attributes {stable_mosaic.version = 11 : i64} {
  func.func @_normalize_kernel(%arg0: i32, %arg1: memref<32x128xf32, #tpu.memory_space<vmem>>, %arg2: memref<32x128xf32, #tpu.memory_space<vmem>>, %arg3: memref<2x32x128xbf16, #tpu.memory_space<vmem>>) attributes {dimension_semantics = [#tpu.dimension_semantics<parallel>], iteration_bounds = array<i64: 1>, scalar_prefetch = 0 : i64, scratch_operands = 0 : i64, tpu.core_type = #tpu.core_type<tc>, window_params = [{transform_indices = @transform_0, window_bounds = array<i64: 32, 128>}, {transform_indices = @transform_1, window_bounds = array<i64: 32, 128>}, {transform_indices = @transform_2, window_bounds = array<i64: 2, 32, 128>}]} {
    %c0 = arith.constant 0 : index
    %c0_0 = arith.constant 0 : index
    %0 = vector.load %arg1[%c0, %c0_0] : memref<32x128xf32, #tpu.memory_space<vmem>>, vector<32x128xf32>
    %1 = arith.mulf %0, %0 : vector<32x128xf32>
    %cst = arith.constant dense<0.000000e+00> : vector<32xf32>
    %2 = vector.multi_reduction <add>, %1, %cst [1] : vector<32x128xf32> to vector<32xf32>
    %3 = vector.shape_cast %2 : vector<32xf32> to vector<32x1xf32>
    %cst_1 = arith.constant 1.000000e-16 : f32
    %4 = vector.broadcast %cst_1 : f32 to vector<32x1xf32>
    %5 = arith.maximumf %3, %4 : vector<32x1xf32>
    %6 = math.rsqrt %5 : vector<32x1xf32>
    %cst_2 = arith.constant 1.41421354 : f32
    %7 = vector.broadcast %cst_2 : f32 to vector<32x1xf32>
    %8 = arith.mulf %6, %7 : vector<32x1xf32>
    %9 = vector.broadcast %8 : vector<32x1xf32> to vector<32x128xf32>
    %10 = arith.mulf %0, %9 : vector<32x128xf32>
    %11 = arith.truncf %10 : vector<32x128xf32> to vector<32x128xbf16>
    %c0_3 = arith.constant 0 : index
    %c0_4 = arith.constant 0 : index
    %c0_5 = arith.constant 0 : index
    %12 = vector.load %arg3[%c0_3, %c0_4, %c0_5] : memref<2x32x128xbf16, #tpu.memory_space<vmem>>, vector<1x32x128xbf16>
    %13 = vector.shape_cast %12 : vector<1x32x128xbf16> to vector<32x128xbf16>
    %14 = vector.shape_cast %11 : vector<32x128xbf16> to vector<1x32x128xbf16>
    tpu.vector_store %arg3[%c0_3, %c0_4, %c0_5], %14 {strides = array<i32>} : memref<2x32x128xbf16, #tpu.memory_space<vmem>>, vector<1x32x128xbf16>,
    %c0_6 = arith.constant 0 : index
    %c0_7 = arith.constant 0 : index
    %15 = vector.load %arg2[%c0_6, %c0_7] : memref<32x128xf32, #tpu.memory_space<vmem>>, vector<32x128xf32>
    %16 = arith.mulf %15, %15 : vector<32x128xf32>
    %cst_8 = arith.constant dense<0.000000e+00> : vector<32xf32>
    %17 = vector.multi_reduction <add>, %16, %cst_8 [1] : vector<32x128xf32> to vector<32xf32>
    %18 = vector.shape_cast %17 : vector<32xf32> to vector<32x1xf32>
    %cst_9 = arith.constant 1.000000e-16 : f32
    %19 = vector.broadcast %cst_9 : f32 to vector<32x1xf32>
    %20 = arith.maximumf %18, %19 : vector<32x1xf32>
    %21 = math.rsqrt %20 : vector<32x1xf32>
    %cst_10 = arith.constant 1.41421354 : f32
    %22 = vector.broadcast %cst_10 : f32 to vector<32x1xf32>
    %23 = arith.mulf %21, %22 : vector<32x1xf32>
    %24 = vector.broadcast %23 : vector<32x1xf32> to vector<32x128xf32>
    %25 = arith.mulf %15, %24 : vector<32x128xf32>
    %26 = arith.truncf %25 : vector<32x128xf32> to vector<32x128xbf16>
    %c1 = arith.constant 1 : index
    %c0_11 = arith.constant 0 : index
    %c0_12 = arith.constant 0 : index
    %27 = vector.load %arg3[%c1, %c0_11, %c0_12] : memref<2x32x128xbf16, #tpu.memory_space<vmem>>, vector<1x32x128xbf16>
    %28 = vector.shape_cast %27 : vector<1x32x128xbf16> to vector<32x128xbf16>
    %29 = vector.shape_cast %26 : vector<32x128xbf16> to vector<1x32x128xbf16>
    tpu.vector_store %arg3[%c1, %c0_11, %c0_12], %29 {strides = array<i32>} : memref<2x32x128xbf16, #tpu.memory_space<vmem>>, vector<1x32x128xbf16>,
    return
  }
  func.func @transform_0(%arg0: i32) -> (i32, i32) {
    %c0_i32 = arith.constant 0 : i32
    %c0_i32_0 = arith.constant 0 : i32
    return %arg0, %c0_i32 : i32, i32
  }
  func.func @transform_1(%arg0: i32) -> (i32, i32) {
    %c0_i32 = arith.constant 0 : i32
    %c0_i32_0 = arith.constant 0 : i32
    return %arg0, %c0_i32 : i32, i32
  }
  func.func @transform_2(%arg0: i32) -> (i32, i32, i32) {
    %c0_i32 = arith.constant 0 : i32
    %c0_i32_0 = arith.constant 0 : i32
    %c0_i32_1 = arith.constant 0 : i32
    return %c0_i32, %arg0, %c0_i32_0 : i32, i32, i32
  }
}

</mosaic_0001>

<llo_original>
// kernel: tpu_custom_call.1
$region0: #{tpu_custom_call.1}
  #allocation0 [shape = 'u32[]', space=smem, size = 0x4, offset = 0x4, fixed_abs, tag = 'smem constant byte address 0x4 - core index']
  #allocation1 [shape = 'u32[144,128]{1,0:T(1,128)}', space=vmem, size = 0x12000, scoped, tag = 'internal scratch']
  %s0 = inlined_call_operand.hbm [shape: f32[32,128], index: 0, kind: input, shape index: {}]
  %s1 = inlined_call_operand.hbm [shape: f32[32,128], index: 1, kind: input, shape index: {}]
  %s2 = inlined_call_operand.hbm [shape: bf16[2,32,128], index: 2, kind: output, shape index: {}]
  %s3 = sld [smem:[#allocation0]]
  $region26: #{tpu_custom_call.1} parent=0
    _
  %s5 = ssub.s32 1, %s3
  %s6 = scalar_select 0, %s5, %s3
  $region1: #{tpu_custom_call.1} parent=0
    #allocation2 [shape = 'u8[16384]{0}', space=vmem, size = 0x4000, scoped, tag = 'input window, operand 0, single buffered']
    #allocation3 [shape = 's32[1]{0}', space=sflag, size = 0x4, scoped, tag = 'scoped memory for tpu_custom_call.1']
    #allocation4 [shape = 's32[1]{0}', space=sflag, size = 0x4, scoped, tag = 'scoped memory for tpu_custom_call.1']
    #allocation5 [shape = 'u8[16384]{0}', space=vmem, size = 0x4000, scoped, tag = 'input window, operand 1, single buffered']
    #allocation6 [shape = 's32[1]{0}', space=sflag, size = 0x4, scoped, tag = 'scoped memory for tpu_custom_call.1']
    #allocation7 [shape = 'u8[16384]{0}', space=vmem, size = 0x4000, scoped, tag = 'output window, operand 0, single buffered']
    %7 = vsyncpa [#allocation3], 0
    %8 = vsyncpa [#allocation6], 0
    %9 = vsyncpa [#allocation4], 0
    // Predicated region
    $region2: #{tpu_custom_call.1} parent=1 // pred_check
      _
    $region3: #{tpu_custom_call.1} parent=1 // pred_check_branch
      %11 = sbr.rel (0) target = $region5
    $region4: #{tpu_custom_call.1} parent=1 // pred_region
      %s13 = ssub.s32 512, 512
      %14 = vsyncadd [#allocation3], %s13
      %s15 = sshll.u32 [#allocation2], 4
      %s16 = int_to_ptr.vmem [resolvable:$true] %s15
      %21 = dma.hbm_to_vmem [thread:$0]  %s0, 512, %s16, [#allocation3], 128, 128, 8
    $region5: #{tpu_custom_call.1} parent=1 // pred_fallthru
      _
    // Predicated region
    $region6: #{tpu_custom_call.1} parent=1 // pred_check
      _
    $region7: #{tpu_custom_call.1} parent=1 // pred_check_branch
      %23 = sbr.rel (0) target = $region9
    $region8: #{tpu_custom_call.1} parent=1 // pred_region
      %s25 = ssub.s32 512, 512
      %26 = vsyncadd [#allocation6], %s25
      %s27 = sshll.u32 [#allocation5], 4
      %s28 = int_to_ptr.vmem [resolvable:$true] %s27
      %33 = dma.hbm_to_vmem [thread:$0]  %s1, 512, %s28, [#allocation6], 128, 128, 8
    $region9: #{tpu_custom_call.1} parent=1 // pred_fallthru
      _
    // Predicated region
    $region10: #{tpu_custom_call.1} parent=1 // pred_check
      _
    $region11: #{tpu_custom_call.1} parent=1 // pred_check_branch
      %35 = sbr.rel (0) target = $region13
    $region12: #{tpu_custom_call.1} parent=1 // pred_region
      %36 = dma.done [#allocation3], 512
    $region13: #{tpu_custom_call.1} parent=1 // pred_fallthru
      _
    // Predicated region
    $region14: #{tpu_custom_call.1} parent=1 // pred_check
      _
    $region15: #{tpu_custom_call.1} parent=1 // pred_check_branch
      %38 = sbr.rel (0) target = $region17
    $region16: #{tpu_custom_call.1} parent=1 // pred_region
      %39 = dma.done [#allocation6], 512
    $region17: #{tpu_custom_call.1} parent=1 // pred_fallthru
      _
    %v40 = vld [vmem:[#allocation2] sm:$0xff]
    %v41 = vld [vmem:[#allocation2 + $0x8] sm:$0xff]
    %v42 = vld [vmem:[#allocation2 + $0x10] sm:$0xff]
    %v43 = vld [vmem:[#allocation2 + $0x18] sm:$0xff]
    %v44 = vmul.f32 %v40, %v40
    %v45 = vmul.f32 %v41, %v41
    %v46 = vmul.f32 %v42, %v42
    %v47 = vmul.f32 %v43, %v43
    %48 = vadd.xlane.f32.xlu0 %v44
    %v49 = vpop.xlane.xlu0 %48
    %50 = vadd.xlane.f32.xlu0 %v45
    %v51 = vpop.xlane.xlu0 %50
    %52 = vadd.xlane.f32.xlu0 %v46
    %v53 = vpop.xlane.xlu0 %52
    %54 = vadd.xlane.f32.xlu0 %v47
    %v55 = vpop.xlane.xlu0 %54
    %v56 = vmax.f32 %v49, 1e-16
    %v57 = vmax.f32 %v51, 1e-16
    %v58 = vmax.f32 %v53, 1e-16
    %v59 = vmax.f32 %v55, 1e-16
    %v60 = vrsqrt.pop %v56
    %v61 = vrsqrt.pop %v57
    %v62 = vrsqrt.pop %v58
    %v63 = vrsqrt.pop %v59
    %v64 = vmul.f32 %v60, 1.4142135
    %v65 = vmul.f32 %v61, 1.4142135
    %v66 = vmul.f32 %v62, 1.4142135
    %v67 = vmul.f32 %v63, 1.4142135
    %v68 = vmul.f32 %v40, %v64
    %v69 = vmul.f32 %v41, %v65
    %v70 = vmul.f32 %v42, %v66
    %v71 = vmul.f32 %v43, %v67
    %v72 = vpack.c.bf16 %v69, %v68
    %v73 = vpack.c.bf16 %v71, %v70
    %v76 = vunpack.c.l.b16 %v72
    %v77 = vunpack.c.h.b16 %v72
    %v78 = vunpack.c.l.b16 %v73
    %v79 = vunpack.c.h.b16 %v73
    %v80 = vpack.c.b16 %v76, %v76
    %v81 = vpack.c.b16 %v77, %v77
    %v82 = vpack.c.b16 %v78, %v78
    %v83 = vpack.c.b16 %v79, %v79
    %88 = vst [vmem:[#allocation7] sm:$0xf] %v80
    %89 = vst [vmem:[#allocation7 + $0x4] sm:$0xf] %v81
    %90 = vst [vmem:[#allocation7 + $0x8] sm:$0xf] %v82
    %91 = vst [vmem:[#allocation7 + $0xc] sm:$0xf] %v83
    %v92 = vld [vmem:[#allocation5] sm:$0xff]
    %v93 = vld [vmem:[#allocation5 + $0x8] sm:$0xff]
    %v94 = vld [vmem:[#allocation5 + $0x10] sm:$0xff]
    %v95 = vld [vmem:[#allocation5 + $0x18] sm:$0xff]
    %v96 = vmul.f32 %v92, %v92
    %v97 = vmul.f32 %v93, %v93
    %v98 = vmul.f32 %v94, %v94
    %v99 = vmul.f32 %v95, %v95
    %100 = vadd.xlane.f32.xlu0 %v96
    %v101 = vpop.xlane.xlu0 %100
    %102 = vadd.xlane.f32.xlu0 %v97
    %v103 = vpop.xlane.xlu0 %102
    %104 = vadd.xlane.f32.xlu0 %v98
    %v105 = vpop.xlane.xlu0 %104
    %106 = vadd.xlane.f32.xlu0 %v99
    %v107 = vpop.xlane.xlu0 %106
    %v108 = vmax.f32 %v101, 1e-16
    %v109 = vmax.f32 %v103, 1e-16
    %v110 = vmax.f32 %v105, 1e-16
    %v111 = vmax.f32 %v107, 1e-16
    %v112 = vrsqrt.pop %v108
    %v113 = vrsqrt.pop %v109
    %v114 = vrsqrt.pop %v110
    %v115 = vrsqrt.pop %v111
    %v116 = vmul.f32 %v112, 1.4142135
    %v117 = vmul.f32 %v113, 1.4142135
    %v118 = vmul.f32 %v114, 1.4142135
    %v119 = vmul.f32 %v115, 1.4142135
    %v120 = vmul.f32 %v92, %v116
    %v121 = vmul.f32 %v93, %v117
    %v122 = vmul.f32 %v94, %v118
    %v123 = vmul.f32 %v95, %v119
    %v124 = vpack.c.bf16 %v121, %v120
    %v125 = vpack.c.bf16 %v123, %v122
    %v128 = vunpack.c.l.b16 %v124
    %v129 = vunpack.c.h.b16 %v124
    %v130 = vunpack.c.l.b16 %v125
    %v131 = vunpack.c.h.b16 %v125
    %v132 = vpack.c.b16 %v128, %v128
    %v133 = vpack.c.b16 %v129, %v129
    %v134 = vpack.c.b16 %v130, %v130
    %v135 = vpack.c.b16 %v131, %v131
    %s140 = scalar_lea.vmem [#allocation7], 16
    %141 = vst [vmem:[%s140] sm:$0xf] %v132
    %142 = vst [vmem:[%s140 + $0x4] sm:$0xf] %v133
    %143 = vst [vmem:[%s140 + $0x8] sm:$0xf] %v134
    %144 = vst [vmem:[%s140 + $0xc] sm:$0xf] %v135
    // Predicated region
    $region18: #{tpu_custom_call.1} parent=1 // pred_check
      _
    $region19: #{tpu_custom_call.1} parent=1 // pred_check_branch
      %146 = sbr.rel (0) target = $region21
    $region20: #{tpu_custom_call.1} parent=1 // pred_region
      %s148 = ssub.s32 512, 512
      %149 = vsyncadd [#allocation4], %s148
      %s150 = sshll.u32 [#allocation7], 4
      %s151 = int_to_ptr.vmem [resolvable:$true] %s150
      %156 = dma.vmem_to_hbm [thread:$0]  %s151, 512, %s2, [#allocation4], 64, 64, 4
    $region21: #{tpu_custom_call.1} parent=1 // pred_fallthru
      _
    // Predicated region
    $region22: #{tpu_custom_call.1} parent=1 // pred_check
      _
    $region23: #{tpu_custom_call.1} parent=1 // pred_check_branch
      %158 = sbr.rel (0) target = $region25
    $region24: #{tpu_custom_call.1} parent=1 // pred_region
      %159 = dma.done [#allocation4], 512
    $region25: #{tpu_custom_call.1} parent=1 // pred_fallthru
      _
    %160 = vsyncpa [#allocation3], 1
    %161 = vsyncpa [#allocation6], 1
    %162 = vsyncpa [#allocation4], 1

</llo_original>
